<compile_context>
chip_gen: v6e
topology: v6e:2x2x1
jax: 0.10.0
libtpu: 0.0.40
codegen_flags: <defaults>
</compile_context>

<pallas_src>
import functools
import math

import jax
import jax.numpy as jnp
from jax.experimental import pallas as pl
from jax.experimental.pallas import tpu as pltpu


def _att_kernel(t_ref, s_ref, m_ref, h_ref, a_ref, *, mxu_bf16):
    """Single-invocation attention over the full (B, T, F) slabs.

    t_ref: (B, Tq, F)   target
    s_ref: (B, Tk, F)   source (keys input AND values — use_source=True)
    m_ref: (B, F, F)    folded weight  M = Wq^T @ Wk / sqrt(qk), pre-broadcast over B
    h_ref: (B, Tq, F)   weighted-sum output
    a_ref: (B, Tq, Tk)  attention weights
    """
    t = t_ref[...]            # f32 — no redundant casts
    s = s_ref[...]
    m = m_ref[...]

    if mxu_bf16:
        # Cast only at the MXU operand boundary; accumulation stays f32.
        t_in = t.astype(jnp.bfloat16)
        s_in = s.astype(jnp.bfloat16)
        m_in = m.astype(jnp.bfloat16)
    else:
        t_in, s_in, m_in = t, s, m

    # (t @ M), batched over B: plain batched MXU contraction — no in-kernel reshapes
    # (reshapes are not views and can materialize VMEM relayout copies).
    tm = jnp.einsum("bqf,bfg->bqg", t_in, m_in,
                    preferred_element_type=jnp.float32)             # (B, Tq, F) f32
    tm_in = tm.astype(jnp.bfloat16) if mxu_bf16 else tm

    # scores = (t @ M) @ s^T : contract the minor dims of both operands (trans_b at the
    # MXU feed) — no materialized transpose, no XLU work.
    scores = jnp.einsum("bqf,bkf->bqk", tm_in, s_in,
                        preferred_element_type=jnp.float32)         # (B, Tq, Tk) f32

    # Numerically-stable softmax over keys (matches F.softmax(dim=-1)), all in f32
    # (v5e has no bf16 VPU/EUP path).  Exact division: the approx-EUP reciprocal saves
    # nothing at this size and its error is visible in a user-facing output.
    smax = jnp.max(scores, axis=-1, keepdims=True)
    e = jnp.exp(scores - smax)
    denom = jnp.sum(e, axis=-1, keepdims=True)
    alphas = e / denom                                              # rows sum to 1

    # dropout(p=0) is identity; values == source (use_source=True).
    p = alphas.astype(jnp.bfloat16) if mxu_bf16 else alphas
    h = jnp.einsum("bqk,bkf->bqf", p, s_in,
                   preferred_element_type=jnp.float32)              # (B, Tq, F) f32

    # TODO(synk): last dims (F=16, Tk=8) are far below 128 lanes -> masked vst.msk
    # stores; at this toy size it is noise, but the gridded large-shape version must
    # use lane-dense (>=128) output tiles.
    h_ref[...] = h.astype(h_ref.dtype)
    a_ref[...] = alphas.astype(a_ref.dtype)


@functools.partial(jax.jit, static_argnames=("qk_size", "mxu_bf16"))
def att_forward(target, source, wq, wk, *, qk_size, mxu_bf16=False):
    """target: (B, Tq, F), source: (B, Tk, F); wq/wk: (qk, F) (PyTorch Linear layout)."""
    B, Tq, F = target.shape
    _, Tk, _ = source.shape

    # Weight fold (jit-folded with the call -> single dispatch):
    #   q @ k^T = t (Wq^T Wk) s^T ; the 1/sqrt(qk) scale is folded in as well.
    # Computed in f32 at HIGHEST precision; cast to bf16 (if requested) only inside the
    # kernel at the MXU feed, so there is no double rounding.
    scale = 1.0 / math.sqrt(float(qk_size))
    m = jnp.matmul(wq.astype(jnp.float32).T, wk.astype(jnp.float32),
                   precision=jax.lax.Precision.HIGHEST) * scale      # (F, F)
    m_b = jnp.broadcast_to(m, (B, F, F))   # batched form -> plain batched MXU matmul

    # Whole problem fits in VMEM at these shapes -> no grid; every array is placed in
    # VMEM whole and the kernel runs exactly once (one launch for all B problems).
    vmem = lambda: pl.BlockSpec(memory_space=pltpu.MemorySpace.VMEM)

    h, alphas = pl.pallas_call(
        functools.partial(_att_kernel, mxu_bf16=mxu_bf16),
        out_shape=(
            jax.ShapeDtypeStruct((B, Tq, F), jnp.float32),
            jax.ShapeDtypeStruct((B, Tq, Tk), jnp.float32),
        ),
        in_specs=[vmem(), vmem(), vmem()],
        out_specs=(vmem(), vmem()),
    )(target, source, m_b)
    return h, alphas


def _reference(target, source, wq, wk, qk_size):
    hi = jax.lax.Precision.HIGHEST
    q = jnp.einsum("bqf,gf->bqg", target, wq, precision=hi)
    k = jnp.einsum("bkf,gf->bkg", source, wk, precision=hi)
    scores = jnp.einsum("bqg,bkg->bqk", q, k, precision=hi) / jnp.sqrt(
        jnp.float32(qk_size))
    alphas = jax.nn.softmax(scores, axis=-1)
    h = jnp.einsum("bqk,bkf->bqf", alphas, source, precision=hi)
    return h, alphas


if __name__ == "__main__":
    # Small shapes consistent with the module: feature_size=16, qk_size=16, seq=8, batch=2.
    B, Tq, Tk, FEAT, QK = 2, 8, 8, 16, 16

    key = jax.random.PRNGKey(0)
    k1, k2 = jax.random.split(key)
    target = jax.random.normal(k1, (B, Tq, FEAT), dtype=jnp.float32)
    source = jax.random.normal(k2, (B, Tk, FEAT), dtype=jnp.float32)

    # Deterministic init, same as is_init=True: softmax over a row of ones == 1/feature_size.
    wq = jax.nn.softmax(jnp.ones((QK, FEAT), jnp.float32), axis=1)
    wk = jax.nn.softmax(jnp.ones((QK, FEAT), jnp.float32), axis=1)
    # W_v exists in the module but is unused when use_source=True (default); kept for fidelity.
    wv = jax.nn.softmax(jnp.ones((FEAT, FEAT), jnp.float32), axis=1)  # noqa: F841

    h_ref, a_ref = _reference(target, source, wq, wk, QK)

    # Default path: f32 MXU feeds + exact softmax division -> tight tolerance.
    h, alphas = att_forward(target, source, wq, wk, qk_size=QK)
    jax.block_until_ready((h, alphas))
    assert jnp.allclose(h, h_ref, atol=1e-4, rtol=1e-4)
    assert jnp.allclose(alphas, a_ref, atol=1e-4, rtol=1e-4)
    assert jnp.allclose(jnp.sum(alphas, axis=-1), 1.0, atol=1e-5)   # exact normalization

    # bf16 MXU-feed path (the large-shape compute lever): operand rounding ~1e-3 -> looser.
    h16, a16 = att_forward(target, source, wq, wk, qk_size=QK, mxu_bf16=True)
    jax.block_until_ready((h16, a16))
    assert jnp.allclose(h16, h_ref, atol=2e-2, rtol=2e-2)
    assert jnp.allclose(a16, a_ref, atol=2e-2, rtol=2e-2)

    print("KERNEL_OK")
</pallas_src>

<mosaic_0001>
module attributes {stable_mosaic.version = 11 : i64} {
  func.func @_att_kernel(%arg0: memref<2x8x16xf32, #tpu.memory_space<vmem>>, %arg1: memref<2x8x16xf32, #tpu.memory_space<vmem>>, %arg2: memref<2x16x16xf32, #tpu.memory_space<vmem>>, %arg3: memref<2x8x16xf32, #tpu.memory_space<vmem>>, %arg4: memref<2x8x8xf32, #tpu.memory_space<vmem>>) attributes {dimension_semantics = [], scalar_prefetch = 0 : i64, scratch_operands = 0 : i64, tpu.core_type = #tpu.core_type<tc>} {
    %c0 = arith.constant 0 : index
    %c0_0 = arith.constant 0 : index
    %c0_1 = arith.constant 0 : index
    %0 = vector.load %arg0[%c0, %c0_0, %c0_1] : memref<2x8x16xf32, #tpu.memory_space<vmem>>, vector<2x8x16xf32>
    %c0_2 = arith.constant 0 : index
    %c0_3 = arith.constant 0 : index
    %c0_4 = arith.constant 0 : index
    %1 = vector.load %arg1[%c0_2, %c0_3, %c0_4] : memref<2x8x16xf32, #tpu.memory_space<vmem>>, vector<2x8x16xf32>
    %c0_5 = arith.constant 0 : index
    %c0_6 = arith.constant 0 : index
    %c0_7 = arith.constant 0 : index
    %2 = vector.load %arg2[%c0_5, %c0_6, %c0_7] : memref<2x16x16xf32, #tpu.memory_space<vmem>>, vector<2x16x16xf32>
    "tpu.trace_start"() <{level = 10 : i32, message = "bqf,bfg->bqg"}> : () -> ()
    %cst = arith.constant dense<0.000000e+00> : vector<2x8x16xf32>
    %3 = tpu.matmul %0, %2, %cst {dimension_numbers = #tpu.dot_dimension_numbers<[2], [1], [1], [2], [0, 0, 0, 1, 1, 2], [0], [0]>} : vector<2x8x16xf32>, vector<2x16x16xf32>, vector<2x8x16xf32> -> vector<2x8x16xf32>
    "tpu.trace_stop"() : () -> ()
    "tpu.trace_start"() <{level = 10 : i32, message = "bqf,bkf->bqk"}> : () -> ()
    %cst_8 = arith.constant dense<0.000000e+00> : vector<2x8x8xf32>
    %4 = tpu.matmul %3, %1, %cst_8 {dimension_numbers = #tpu.dot_dimension_numbers<[2], [2], [1], [1], [0, 0, 0, 1, 1, 1], [0], [0]>} : vector<2x8x16xf32>, vector<2x8x16xf32>, vector<2x8x8xf32> -> vector<2x8x8xf32>
    "tpu.trace_stop"() : () -> ()
    %cst_9 = arith.constant dense<0xFF800000> : vector<2x8xf32>
    %5 = vector.multi_reduction <maximumf>, %4, %cst_9 [2] : vector<2x8x8xf32> to vector<2x8xf32>
    %6 = vector.shape_cast %5 : vector<2x8xf32> to vector<2x8x1xf32>
    %7 = vector.broadcast %6 : vector<2x8x1xf32> to vector<2x8x8xf32>
    %8 = arith.subf %4, %7 : vector<2x8x8xf32>
    %9 = math.exp %8 : vector<2x8x8xf32>
    %cst_10 = arith.constant dense<0.000000e+00> : vector<2x8xf32>
    %10 = vector.multi_reduction <add>, %9, %cst_10 [2] : vector<2x8x8xf32> to vector<2x8xf32>
    %11 = vector.shape_cast %10 : vector<2x8xf32> to vector<2x8x1xf32>
    %12 = vector.broadcast %11 : vector<2x8x1xf32> to vector<2x8x8xf32>
    %13 = arith.divf %9, %12 : vector<2x8x8xf32>
    "tpu.trace_start"() <{level = 10 : i32, message = "bqk,bkf->bqf"}> : () -> ()
    %cst_11 = arith.constant dense<0.000000e+00> : vector<2x8x16xf32>
    %14 = tpu.matmul %13, %1, %cst_11 {dimension_numbers = #tpu.dot_dimension_numbers<[2], [1], [1], [2], [0, 0, 0, 1, 1, 2], [0], [0]>} : vector<2x8x8xf32>, vector<2x8x16xf32>, vector<2x8x16xf32> -> vector<2x8x16xf32>
    "tpu.trace_stop"() : () -> ()
    %c0_12 = arith.constant 0 : index
    %c0_13 = arith.constant 0 : index
    %c0_14 = arith.constant 0 : index
    %15 = vector.load %arg3[%c0_12, %c0_13, %c0_14] : memref<2x8x16xf32, #tpu.memory_space<vmem>>, vector<2x8x16xf32>
    tpu.vector_store %arg3[%c0_12, %c0_13, %c0_14], %14 {strides = array<i32>} : memref<2x8x16xf32, #tpu.memory_space<vmem>>, vector<2x8x16xf32>,
    %c0_15 = arith.constant 0 : index
    %c0_16 = arith.constant 0 : index
    %c0_17 = arith.constant 0 : index
    %16 = vector.load %arg4[%c0_15, %c0_16, %c0_17] : memref<2x8x8xf32, #tpu.memory_space<vmem>>, vector<2x8x8xf32>
    tpu.vector_store %arg4[%c0_15, %c0_16, %c0_17], %13 {strides = array<i32>} : memref<2x8x8xf32, #tpu.memory_space<vmem>>, vector<2x8x8xf32>,
    return
  }
}

</mosaic_0001>

<llo_original>
// kernel: att_forward.1
$region0: #{att_forward.1}
  #allocation0 [shape = 'u32[]', space=smem, size = 0x4, offset = 0x4, fixed_abs, tag = 'smem constant byte address 0x4 - core index']
  #allocation1 [shape = 'u32[144,128]{1,0:T(1,128)}', space=vmem, size = 0x12000, scoped, tag = 'internal scratch']
  %s0 = inlined_call_operand.vmem [shape: f32[2,8,16], index: 0, kind: input, shape index: {}]
  %s1 = inlined_call_operand.vmem [shape: f32[2,8,16], index: 1, kind: input, shape index: {}]
  %s2 = inlined_call_operand.vmem [shape: f32[2,16,16], index: 2, kind: input, shape index: {}]
  %s3 = inlined_call_operand.hbm [shape: f32[2,8,16], index: 3, kind: output, shape index: {0}]
  %s4 = inlined_call_operand.hbm [shape: f32[2,8,8], index: 4, kind: output, shape index: {1}]
  %5 = xla_tuple %s3, %s4
  %s6 = sld [smem:[#allocation0]]
  $region30: #{att_forward.1} parent=0
    _
  %s8 = ssub.s32 1, %s6
  %s9 = scalar_select 0, %s8, %s6
  $region1: #{att_forward.1} parent=0
    #allocation2 [shape = 'u8[8192]{0}', space=vmem, size = 0x2000, scoped, tag = 'output window, operand 0, single buffered']
    #allocation3 [shape = 's32[1]{0}', space=sflag, size = 0x4, scoped, tag = 'scoped memory for att_forward.1']
    #allocation4 [shape = 'u8[8192]{0}', space=vmem, size = 0x2000, scoped, tag = 'output window, operand 1, single buffered']
    #allocation5 [shape = 's32[1]{0}', space=sflag, size = 0x4, scoped, tag = 'scoped memory for att_forward.1']
    %10 = vsyncpa [#allocation3], 0
    %11 = vsyncpa [#allocation5], 0
    // Predicated region
    $region2: #{att_forward.1} parent=1 // pred_check
      _
    $region3: #{att_forward.1} parent=1 // pred_check_branch
      %13 = sbr.rel (0) target = $region5
    $region4: #{att_forward.1} parent=1 // pred_region
      _
    $region5: #{att_forward.1} parent=1 // pred_fallthru
      _
    // Predicated region
    $region6: #{att_forward.1} parent=1 // pred_check
      _
    $region7: #{att_forward.1} parent=1 // pred_check_branch
      %15 = sbr.rel (0) target = $region9
    $region8: #{att_forward.1} parent=1 // pred_region
      _
    $region9: #{att_forward.1} parent=1 // pred_fallthru
      _
    // Predicated region
    $region10: #{att_forward.1} parent=1 // pred_check
      _
    $region11: #{att_forward.1} parent=1 // pred_check_branch
      %17 = sbr.rel (0) target = $region13
    $region12: #{att_forward.1} parent=1 // pred_region
      _
    $region13: #{att_forward.1} parent=1 // pred_fallthru
      _
    %v18 = vld [vmem:[%s0] sm:$0xff]
    %v19 = vld [vmem:[%s0 + $0x8] sm:$0xff]
    %v20 = vld [vmem:[%s1] sm:$0xff]
    %v21 = vld [vmem:[%s1 + $0x8] sm:$0xff]
    %v22 = vld [vmem:[%s2] sm:$0xff]
    %v23 = vld [vmem:[%s2 + $0x8] sm:$0xff]
    %v24 = vld [vmem:[%s2 + $0x10] sm:$0xff]
    %v25 = vld [vmem:[%s2 + $0x18] sm:$0xff]
    %vm26 = vcmask 130048
    %v28 = vsel %vm26, %v18, 0
    %30 = vmatprep.subr.mxu0 0.0
    %31 = vmatpush1.msra.mxu0 0.0
    %32 = vmatprep.subr.mxu0 0.0
    %33 = vmatpush1.msra.mxu0 0.0
    %34 = vmatprep.subr.mxu0 0.0
    %35 = vmatpush1.msra.mxu0 0.0
    %36 = vmatprep.subr.mxu0 0.0
    %37 = vmatpush1.msra.mxu0 0.0
    %38 = vmatprep.subr.mxu0 0.0
    %39 = vmatpush1.msra.mxu0 0.0
    %40 = vmatprep.subr.mxu0 0.0
    %41 = vmatpush1.msra.mxu0 0.0
    %42 = vmatprep.subr.mxu0 0.0
    %43 = vmatpush1.msra.mxu0 0.0
    %44 = vmatprep.subr.mxu0 0.0
    %45 = vmatpush1.msra.mxu0 0.0
    %46 = vmatprep.subr.mxu0 0.0
    %47 = vmatpush1.msra.mxu0 0.0
    %48 = vmatprep.subr.mxu0 0.0
    %49 = vmatpush1.msra.mxu0 0.0
    %50 = vmatprep.subr.mxu0 0.0
    %51 = vmatpush1.msra.mxu0 0.0
    %52 = vmatprep.subr.mxu0 0.0
    %53 = vmatpush1.msra.mxu0 0.0
    %54 = vmatprep.subr.mxu0 0.0
    %55 = vmatpush1.msra.mxu0 0.0
    %56 = vmatprep.subr.mxu0 0.0
    %57 = vmatpush1.msra.mxu0 0.0
    %58 = vmatprep.subr.mxu0 0.0
    %59 = vmatpush1.msra.mxu0 %v23
    %60 = vmatprep.subr.mxu0 0.0
    %61 = vmatpush1.msra.mxu0 %v22
    %62 = vmatprep.subr.mxu0 0.0
    %63 = vmatpush2.msra.mxu0 0.0
    %64 = vmatprep.subr.mxu0 0.0
    %65 = vmatpush2.msra.mxu0 0.0
    %66 = vmatprep.subr.mxu0 0.0
    %67 = vmatpush2.msra.mxu0 0.0
    %68 = vmatprep.subr.mxu0 0.0
    %69 = vmatpush2.msra.mxu0 0.0
    %70 = vmatprep.subr.mxu0 0.0
    %71 = vmatpush2.msra.mxu0 0.0
    %72 = vmatprep.subr.mxu0 0.0
    %73 = vmatpush2.msra.mxu0 0.0
    %74 = vmatprep.subr.mxu0 0.0
    %75 = vmatpush2.msra.mxu0 0.0
    %76 = vmatprep.subr.mxu0 0.0
    %77 = vmatpush2.msra.mxu0 0.0
    %78 = vmatprep.subr.mxu0 0.0
    %79 = vmatpush2.msra.mxu0 0.0
    %80 = vmatprep.subr.mxu0 0.0
    %81 = vmatpush2.msra.mxu0 0.0
    %82 = vmatprep.subr.mxu0 0.0
    %83 = vmatpush2.msra.mxu0 0.0
    %84 = vmatprep.subr.mxu0 0.0
    %85 = vmatpush2.msra.mxu0 0.0
    %86 = vmatprep.subr.mxu0 0.0
    %87 = vmatpush2.msra.mxu0 0.0
    %88 = vmatprep.subr.mxu0 0.0
    %89 = vmatpush2.msra.mxu0 0.0
    %90 = vmatprep.subr.mxu0 0.0
    %91 = vmatpush2.msra.mxu0 0.0
    %92 = vmatprep.subr.mxu0 0.0
    %93 = vmatpush2.msra.mxu0 0.0
    %94 = vmatprep.mubr.f32.mxu0 0.0
    %95 = vmatmul.mubr.f32.gmra.mxu0 %v28
    %v96 = vpop.f32.mrf.mxu0
    %v97 = vadd.f32 0.0, %v96
    %v98 = vpop.f32.mrf.mxu0
    %99 = vdwg.mxu0
    %v101 = vsel %vm26, %v19, 0
    %103 = vmatprep.subr.mxu0 0.0
    %104 = vmatpush1.msra.mxu0 0.0
    %105 = vmatprep.subr.mxu0 0.0
    %106 = vmatpush1.msra.mxu0 0.0
    %107 = vmatprep.subr.mxu0 0.0
    %108 = vmatpush1.msra.mxu0 0.0
    %109 = vmatprep.subr.mxu0 0.0
    %110 = vmatpush1.msra.mxu0 0.0
    %111 = vmatprep.subr.mxu0 0.0
    %112 = vmatpush1.msra.mxu0 0.0
    %113 = vmatprep.subr.mxu0 0.0
    %114 = vmatpush1.msra.mxu0 0.0
    %115 = vmatprep.subr.mxu0 0.0
    %116 = vmatpush1.msra.mxu0 0.0
    %117 = vmatprep.subr.mxu0 0.0
    %118 = vmatpush1.msra.mxu0 0.0
    %119 = vmatprep.subr.mxu0 0.0
    %120 = vmatpush1.msra.mxu0 0.0
    %121 = vmatprep.subr.mxu0 0.0
    %122 = vmatpush1.msra.mxu0 0.0
    %123 = vmatprep.subr.mxu0 0.0
    %124 = vmatpush1.msra.mxu0 0.0
    %125 = vmatprep.subr.mxu0 0.0
    %126 = vmatpush1.msra.mxu0 0.0
    %127 = vmatprep.subr.mxu0 0.0
    %128 = vmatpush1.msra.mxu0 0.0
    %129 = vmatprep.subr.mxu0 0.0
    %130 = vmatpush1.msra.mxu0 0.0
    %131 = vmatprep.subr.mxu0 0.0
    %132 = vmatpush1.msra.mxu0 %v25
    %133 = vmatprep.subr.mxu0 0.0
    %134 = vmatpush1.msra.mxu0 %v24
    %135 = vmatprep.subr.mxu0 0.0
    %136 = vmatpush2.msra.mxu0 0.0
    %137 = vmatprep.subr.mxu0 0.0
    %138 = vmatpush2.msra.mxu0 0.0
    %139 = vmatprep.subr.mxu0 0.0
    %140 = vmatpush2.msra.mxu0 0.0
    %141 = vmatprep.subr.mxu0 0.0
    %142 = vmatpush2.msra.mxu0 0.0
    %143 = vmatprep.subr.mxu0 0.0
    %144 = vmatpush2.msra.mxu0 0.0
    %145 = vmatprep.subr.mxu0 0.0
    %146 = vmatpush2.msra.mxu0 0.0
    %147 = vmatprep.subr.mxu0 0.0
    %148 = vmatpush2.msra.mxu0 0.0
    %149 = vmatprep.subr.mxu0 0.0
    %150 = vmatpush2.msra.mxu0 0.0
    %151 = vmatprep.subr.mxu0 0.0
    %152 = vmatpush2.msra.mxu0 0.0
    %153 = vmatprep.subr.mxu0 0.0
    %154 = vmatpush2.msra.mxu0 0.0
    %155 = vmatprep.subr.mxu0 0.0
    %156 = vmatpush2.msra.mxu0 0.0
    %157 = vmatprep.subr.mxu0 0.0
    %158 = vmatpush2.msra.mxu0 0.0
    %159 = vmatprep.subr.mxu0 0.0
    %160 = vmatpush2.msra.mxu0 0.0
    %161 = vmatprep.subr.mxu0 0.0
    %162 = vmatpush2.msra.mxu0 0.0
    %163 = vmatprep.subr.mxu0 0.0
    %164 = vmatpush2.msra.mxu0 0.0
    %165 = vmatprep.subr.mxu0 0.0
    %166 = vmatpush2.msra.mxu0 0.0
    %167 = vmatprep.mubr.f32.mxu0 0.0
    %168 = vmatmul.mubr.f32.gmra.mxu0 %v101
    %v169 = vpop.f32.mrf.mxu0
    %v170 = vadd.f32 0.0, %v169
    %v171 = vpop.f32.mrf.mxu0
    %172 = vdwg.mxu0
    %v174 = vsel %vm26, %v97, 0
    %v177 = vsel %vm26, %v20, 0
    %179 = vmatprep.subr.mxu0 0.0
    %180 = vmatpush1.xpose.msra.mxu0 0.0
    %181 = vmatprep.subr.mxu0 0.0
    %182 = vmatpush1.xpose.msra.mxu0 0.0
    %183 = vmatprep.subr.mxu0 0.0
    %184 = vmatpush1.xpose.msra.mxu0 0.0
    %185 = vmatprep.subr.mxu0 0.0
    %186 = vmatpush1.xpose.msra.mxu0 0.0
    %187 = vmatprep.subr.mxu0 0.0
    %188 = vmatpush1.xpose.msra.mxu0 0.0
    %189 = vmatprep.subr.mxu0 0.0
    %190 = vmatpush1.xpose.msra.mxu0 0.0
    %191 = vmatprep.subr.mxu0 0.0
    %192 = vmatpush1.xpose.msra.mxu0 0.0
    %193 = vmatprep.subr.mxu0 0.0
    %194 = vmatpush1.xpose.msra.mxu0 0.0
    %195 = vmatprep.subr.mxu0 0.0
    %196 = vmatpush1.xpose.msra.mxu0 0.0
    %197 = vmatprep.subr.mxu0 0.0
    %198 = vmatpush1.xpose.msra.mxu0 0.0
    %199 = vmatprep.subr.mxu0 0.0
    %200 = vmatpush1.xpose.msra.mxu0 0.0
    %201 = vmatprep.subr.mxu0 0.0
    %202 = vmatpush1.xpose.msra.mxu0 0.0
    %203 = vmatprep.subr.mxu0 0.0
    %204 = vmatpush1.xpose.msra.mxu0 0.0
    %205 = vmatprep.subr.mxu0 0.0
    %206 = vmatpush1.xpose.msra.mxu0 0.0
    %207 = vmatprep.subr.mxu0 0.0
    %208 = vmatpush1.xpose.msra.mxu0 0.0
    %209 = vmatprep.subr.mxu0 0.0
    %210 = vmatpush1.xpose.msra.mxu0 %v177
    %211 = vmatprep.subr.mxu0 0.0
    %212 = vmatpush2.xpose.msra.mxu0 0.0
    %213 = vmatprep.subr.mxu0 0.0
    %214 = vmatpush2.xpose.msra.mxu0 0.0
    %215 = vmatprep.subr.mxu0 0.0
    %216 = vmatpush2.xpose.msra.mxu0 0.0
    %217 = vmatprep.subr.mxu0 0.0
    %218 = vmatpush2.xpose.msra.mxu0 0.0
    %219 = vmatprep.subr.mxu0 0.0
    %220 = vmatpush2.xpose.msra.mxu0 0.0
    %221 = vmatprep.subr.mxu0 0.0
    %222 = vmatpush2.xpose.msra.mxu0 0.0
    %223 = vmatprep.subr.mxu0 0.0
    %224 = vmatpush2.xpose.msra.mxu0 0.0
    %225 = vmatprep.subr.mxu0 0.0
    %226 = vmatpush2.xpose.msra.mxu0 0.0
    %227 = vmatprep.subr.mxu0 0.0
    %228 = vmatpush2.xpose.msra.mxu0 0.0
    %229 = vmatprep.subr.mxu0 0.0
    %230 = vmatpush2.xpose.msra.mxu0 0.0
    %231 = vmatprep.subr.mxu0 0.0
    %232 = vmatpush2.xpose.msra.mxu0 0.0
    %233 = vmatprep.subr.mxu0 0.0
    %234 = vmatpush2.xpose.msra.mxu0 0.0
    %235 = vmatprep.subr.mxu0 0.0
    %236 = vmatpush2.xpose.msra.mxu0 0.0
    %237 = vmatprep.subr.mxu0 0.0
    %238 = vmatpush2.xpose.msra.mxu0 0.0
    %239 = vmatprep.subr.mxu0 0.0
    %240 = vmatpush2.xpose.msra.mxu0 0.0
    %241 = vmatprep.subr.mxu0 0.0
    %242 = vmatpush2.xpose.msra.mxu0 0.0
    %243 = vmatprep.mubr.f32.mxu0 0.0
    %244 = vmatmul.mubr.f32.gmra.mxu0 %v174
    %v245 = vpop.f32.mrf.mxu0
    %v246 = vadd.f32 0.0, %v245
    %v247 = vpop.f32.mrf.mxu0
    %248 = vdwg.mxu0
    %v250 = vsel %vm26, %v170, 0
    %v253 = vsel %vm26, %v21, 0
    %255 = vmatprep.subr.mxu0 0.0
    %256 = vmatpush1.xpose.msra.mxu0 0.0
    %257 = vmatprep.subr.mxu0 0.0
    %258 = vmatpush1.xpose.msra.mxu0 0.0
    %259 = vmatprep.subr.mxu0 0.0
    %260 = vmatpush1.xpose.msra.mxu0 0.0
    %261 = vmatprep.subr.mxu0 0.0
    %262 = vmatpush1.xpose.msra.mxu0 0.0
    %263 = vmatprep.subr.mxu0 0.0
    %264 = vmatpush1.xpose.msra.mxu0 0.0
    %265 = vmatprep.subr.mxu0 0.0
    %266 = vmatpush1.xpose.msra.mxu0 0.0
    %267 = vmatprep.subr.mxu0 0.0
    %268 = vmatpush1.xpose.msra.mxu0 0.0
    %269 = vmatprep.subr.mxu0 0.0
    %270 = vmatpush1.xpose.msra.mxu0 0.0
    %271 = vmatprep.subr.mxu0 0.0
    %272 = vmatpush1.xpose.msra.mxu0 0.0
    %273 = vmatprep.subr.mxu0 0.0
    %274 = vmatpush1.xpose.msra.mxu0 0.0
    %275 = vmatprep.subr.mxu0 0.0
    %276 = vmatpush1.xpose.msra.mxu0 0.0
    %277 = vmatprep.subr.mxu0 0.0
    %278 = vmatpush1.xpose.msra.mxu0 0.0
    %279 = vmatprep.subr.mxu0 0.0
    %280 = vmatpush1.xpose.msra.mxu0 0.0
    %281 = vmatprep.subr.mxu0 0.0
    %282 = vmatpush1.xpose.msra.mxu0 0.0
    %283 = vmatprep.subr.mxu0 0.0
    %284 = vmatpush1.xpose.msra.mxu0 0.0
    %285 = vmatprep.subr.mxu0 0.0
    %286 = vmatpush1.xpose.msra.mxu0 %v253
    %287 = vmatprep.subr.mxu0 0.0
    %288 = vmatpush2.xpose.msra.mxu0 0.0
    %289 = vmatprep.subr.mxu0 0.0
    %290 = vmatpush2.xpose.msra.mxu0 0.0
    %291 = vmatprep.subr.mxu0 0.0
    %292 = vmatpush2.xpose.msra.mxu0 0.0
    %293 = vmatprep.subr.mxu0 0.0
    %294 = vmatpush2.xpose.msra.mxu0 0.0
    %295 = vmatprep.subr.mxu0 0.0
    %296 = vmatpush2.xpose.msra.mxu0 0.0
    %297 = vmatprep.subr.mxu0 0.0
    %298 = vmatpush2.xpose.msra.mxu0 0.0
    %299 = vmatprep.subr.mxu0 0.0
    %300 = vmatpush2.xpose.msra.mxu0 0.0
    %301 = vmatprep.subr.mxu0 0.0
    %302 = vmatpush2.xpose.msra.mxu0 0.0
    %303 = vmatprep.subr.mxu0 0.0
    %304 = vmatpush2.xpose.msra.mxu0 0.0
    %305 = vmatprep.subr.mxu0 0.0
    %306 = vmatpush2.xpose.msra.mxu0 0.0
    %307 = vmatprep.subr.mxu0 0.0
    %308 = vmatpush2.xpose.msra.mxu0 0.0
    %309 = vmatprep.subr.mxu0 0.0
    %310 = vmatpush2.xpose.msra.mxu0 0.0
    %311 = vmatprep.subr.mxu0 0.0
    %312 = vmatpush2.xpose.msra.mxu0 0.0
    %313 = vmatprep.subr.mxu0 0.0
    %314 = vmatpush2.xpose.msra.mxu0 0.0
    %315 = vmatprep.subr.mxu0 0.0
    %316 = vmatpush2.xpose.msra.mxu0 0.0
    %317 = vmatprep.subr.mxu0 0.0
    %318 = vmatpush2.xpose.msra.mxu0 0.0
    %319 = vmatprep.mubr.f32.mxu0 0.0
    %320 = vmatmul.mubr.f32.gmra.mxu0 %v250
    %v321 = vpop.f32.mrf.mxu0
    %v322 = vadd.f32 0.0, %v321
    %v323 = vpop.f32.mrf.mxu0
    %324 = vdwg.mxu0
    %vm325 = vcmask 64512
    %v326 = vsel %vm325, %v246, -inf
    %327 = vmax.xlane.f32.xlu0 %v326
    %v328 = vpop.xlane.xlu0 %327
    %v329 = vsel %vm325, %v322, -inf
    %330 = vmax.xlane.f32.xlu0 %v329
    %v331 = vpop.xlane.xlu0 %330
    %v332 = vsub.f32 %v246, %v328
    %v333 = vsub.f32 %v322, %v331
    %v334 = vmul.f32 %v332, 1.442695
    %v335 = vpow.pop %v334
    %v336 = vmul.f32 %v333, 1.442695
    %v337 = vpow.pop %v336
    %v338 = vsel %vm325, %v335, 0.0
    %339 = vadd.xlane.f32.xlu0 %v338
    %v340 = vpop.xlane.xlu0 %339
    %v341 = vsel %vm325, %v337, 0.0
    %342 = vadd.xlane.f32.xlu0 %v341
    %v343 = vpop.xlane.xlu0 %342
    %v344 = vrcp.pop %v340
    %v345 = vmul.f32 %v335, %v344
    %v346 = vrcp.pop %v343
    %v347 = vmul.f32 %v337, %v346
    %v349 = vsel %vm325, %v345, 0
    %351 = vmatprep.subr.mxu0 0.0
    %352 = vmatpush1.msra.mxu0 0.0
    %353 = vmatprep.subr.mxu0 0.0
    %354 = vmatpush1.msra.mxu0 0.0
    %355 = vmatprep.subr.mxu0 0.0
    %356 = vmatpush1.msra.mxu0 0.0
    %357 = vmatprep.subr.mxu0 0.0
    %358 = vmatpush1.msra.mxu0 0.0
    %359 = vmatprep.subr.mxu0 0.0
    %360 = vmatpush1.msra.mxu0 0.0
    %361 = vmatprep.subr.mxu0 0.0
    %362 = vmatpush1.msra.mxu0 0.0
    %363 = vmatprep.subr.mxu0 0.0
    %364 = vmatpush1.msra.mxu0 0.0
    %365 = vmatprep.subr.mxu0 0.0
    %366 = vmatpush1.msra.mxu0 0.0
    %367 = vmatprep.subr.mxu0 0.0
    %368 = vmatpush1.msra.mxu0 0.0
    %369 = vmatprep.subr.mxu0 0.0
    %370 = vmatpush1.msra.mxu0 0.0
    %371 = vmatprep.subr.mxu0 0.0
    %372 = vmatpush1.msra.mxu0 0.0
    %373 = vmatprep.subr.mxu0 0.0
    %374 = vmatpush1.msra.mxu0 0.0
    %375 = vmatprep.subr.mxu0 0.0
    %376 = vmatpush1.msra.mxu0 0.0
    %377 = vmatprep.subr.mxu0 0.0
    %378 = vmatpush1.msra.mxu0 0.0
    %379 = vmatprep.subr.mxu0 0.0
    %380 = vmatpush1.msra.mxu0 0.0
    %381 = vmatprep.subr.mxu0 0.0
    %382 = vmatpush1.msra.mxu0 %v20
    %383 = vmatprep.subr.mxu0 0.0
    %384 = vmatpush2.msra.mxu0 0.0
    %385 = vmatprep.subr.mxu0 0.0
    %386 = vmatpush2.msra.mxu0 0.0
    %387 = vmatprep.subr.mxu0 0.0
    %388 = vmatpush2.msra.mxu0 0.0
    %389 = vmatprep.subr.mxu0 0.0
    %390 = vmatpush2.msra.mxu0 0.0
    %391 = vmatprep.subr.mxu0 0.0
    %392 = vmatpush2.msra.mxu0 0.0
    %393 = vmatprep.subr.mxu0 0.0
    %394 = vmatpush2.msra.mxu0 0.0
    %395 = vmatprep.subr.mxu0 0.0
    %396 = vmatpush2.msra.mxu0 0.0
    %397 = vmatprep.subr.mxu0 0.0
    %398 = vmatpush2.msra.mxu0 0.0
    %399 = vmatprep.subr.mxu0 0.0
    %400 = vmatpush2.msra.mxu0 0.0
    %401 = vmatprep.subr.mxu0 0.0
    %402 = vmatpush2.msra.mxu0 0.0
    %403 = vmatprep.subr.mxu0 0.0
    %404 = vmatpush2.msra.mxu0 0.0
    %405 = vmatprep.subr.mxu0 0.0
    %406 = vmatpush2.msra.mxu0 0.0
    %407 = vmatprep.subr.mxu0 0.0
    %408 = vmatpush2.msra.mxu0 0.0
    %409 = vmatprep.subr.mxu0 0.0
    %410 = vmatpush2.msra.mxu0 0.0
    %411 = vmatprep.subr.mxu0 0.0
    %412 = vmatpush2.msra.mxu0 0.0
    %413 = vmatprep.subr.mxu0 0.0
    %414 = vmatpush2.msra.mxu0 0.0
    %415 = vmatprep.mubr.f32.mxu0 0.0
    %416 = vmatmul.mubr.f32.gmra.mxu0 %v349
    %v417 = vpop.f32.mrf.mxu0
    %v418 = vadd.f32 0.0, %v417
    %v419 = vpop.f32.mrf.mxu0
    %420 = vdwg.mxu0
    %v422 = vsel %vm325, %v347, 0
    %424 = vmatprep.subr.mxu0 0.0
    %425 = vmatpush1.msra.mxu0 0.0
    %426 = vmatprep.subr.mxu0 0.0
    %427 = vmatpush1.msra.mxu0 0.0
    %428 = vmatprep.subr.mxu0 0.0
    %429 = vmatpush1.msra.mxu0 0.0
    %430 = vmatprep.subr.mxu0 0.0
    %431 = vmatpush1.msra.mxu0 0.0
    %432 = vmatprep.subr.mxu0 0.0
    %433 = vmatpush1.msra.mxu0 0.0
    %434 = vmatprep.subr.mxu0 0.0
    %435 = vmatpush1.msra.mxu0 0.0
    %436 = vmatprep.subr.mxu0 0.0
    %437 = vmatpush1.msra.mxu0 0.0
    %438 = vmatprep.subr.mxu0 0.0
    %439 = vmatpush1.msra.mxu0 0.0
    %440 = vmatprep.subr.mxu0 0.0
    %441 = vmatpush1.msra.mxu0 0.0
    %442 = vmatprep.subr.mxu0 0.0
    %443 = vmatpush1.msra.mxu0 0.0
    %444 = vmatprep.subr.mxu0 0.0
    %445 = vmatpush1.msra.mxu0 0.0
    %446 = vmatprep.subr.mxu0 0.0
    %447 = vmatpush1.msra.mxu0 0.0
    %448 = vmatprep.subr.mxu0 0.0
    %449 = vmatpush1.msra.mxu0 0.0
    %450 = vmatprep.subr.mxu0 0.0
    %451 = vmatpush1.msra.mxu0 0.0
    %452 = vmatprep.subr.mxu0 0.0
    %453 = vmatpush1.msra.mxu0 0.0
    %454 = vmatprep.subr.mxu0 0.0
    %455 = vmatpush1.msra.mxu0 %v21
    %456 = vmatprep.subr.mxu0 0.0
    %457 = vmatpush2.msra.mxu0 0.0
    %458 = vmatprep.subr.mxu0 0.0
    %459 = vmatpush2.msra.mxu0 0.0
    %460 = vmatprep.subr.mxu0 0.0
    %461 = vmatpush2.msra.mxu0 0.0
    %462 = vmatprep.subr.mxu0 0.0
    %463 = vmatpush2.msra.mxu0 0.0
    %464 = vmatprep.subr.mxu0 0.0
    %465 = vmatpush2.msra.mxu0 0.0
    %466 = vmatprep.subr.mxu0 0.0
    %467 = vmatpush2.msra.mxu0 0.0
    %468 = vmatprep.subr.mxu0 0.0
    %469 = vmatpush2.msra.mxu0 0.0
    %470 = vmatprep.subr.mxu0 0.0
    %471 = vmatpush2.msra.mxu0 0.0
    %472 = vmatprep.subr.mxu0 0.0
    %473 = vmatpush2.msra.mxu0 0.0
    %474 = vmatprep.subr.mxu0 0.0
    %475 = vmatpush2.msra.mxu0 0.0
    %476 = vmatprep.subr.mxu0 0.0
    %477 = vmatpush2.msra.mxu0 0.0
    %478 = vmatprep.subr.mxu0 0.0
    %479 = vmatpush2.msra.mxu0 0.0
    %480 = vmatprep.subr.mxu0 0.0
    %481 = vmatpush2.msra.mxu0 0.0
    %482 = vmatprep.subr.mxu0 0.0
    %483 = vmatpush2.msra.mxu0 0.0
    %484 = vmatprep.subr.mxu0 0.0
    %485 = vmatpush2.msra.mxu0 0.0
    %486 = vmatprep.subr.mxu0 0.0
    %487 = vmatpush2.msra.mxu0 0.0
    %488 = vmatprep.mubr.f32.mxu0 0.0
    %489 = vmatmul.mubr.f32.gmra.mxu0 %v422
    %v490 = vpop.f32.mrf.mxu0
    %v491 = vadd.f32 0.0, %v490
    %v492 = vpop.f32.mrf.mxu0
    %493 = vdwg.mxu0
    %494 = vst.msk [vmem:[#allocation2] sm:$0xff] %vm26, %v418
    %495 = vst.msk [vmem:[#allocation2 + $0x8] sm:$0xff] %vm26, %v491
    %496 = vst.msk [vmem:[#allocation4] sm:$0xff] %vm325, %v345
    %497 = vst.msk [vmem:[#allocation4 + $0x8] sm:$0xff] %vm325, %v347
    // Predicated region
    $region14: #{att_forward.1} parent=1 // pred_check
      _
    $region15: #{att_forward.1} parent=1 // pred_check_branch
      %499 = sbr.rel (0) target = $region17
    $region16: #{att_forward.1} parent=1 // pred_region
      %s501 = ssub.s32 256, 256
      %502 = vsyncadd [#allocation3], %s501
      %s503 = sshll.u32 [#allocation2], 4
      %s504 = int_to_ptr.vmem [resolvable:$true] %s503
      %509 = dma.vmem_to_hbm [thread:$0]  %s504, 256, %s3, [#allocation3], 128, 128, 8
    $region17: #{att_forward.1} parent=1 // pred_fallthru
      _
    // Predicated region
    $region18: #{att_forward.1} parent=1 // pred_check
      _
    $region19: #{att_forward.1} parent=1 // pred_check_branch
      %511 = sbr.rel (0) target = $region21
    $region20: #{att_forward.1} parent=1 // pred_region
      %s513 = ssub.s32 256, 256
      %514 = vsyncadd [#allocation5], %s513
      %s515 = sshll.u32 [#allocation4], 4
      %s516 = int_to_ptr.vmem [resolvable:$true] %s515
      %521 = dma.vmem_to_hbm [thread:$0]  %s516, 256, %s4, [#allocation5], 128, 128, 8
    $region21: #{att_forward.1} parent=1 // pred_fallthru
      _
    // Predicated region
    $region22: #{att_forward.1} parent=1 // pred_check
      _
    $region23: #{att_forward.1} parent=1 // pred_check_branch
      %523 = sbr.rel (0) target = $region25
    $region24: #{att_forward.1} parent=1 // pred_region
      %524 = dma.done [#allocation3], 256
    $region25: #{att_forward.1} parent=1 // pred_fallthru
      _
    // Predicated region
    $region26: #{att_forward.1} parent=1 // pred_check
      _
    $region27: #{att_forward.1} parent=1 // pred_check_branch
      %526 = sbr.rel (0) target = $region29
    $region28: #{att_forward.1} parent=1 // pred_region
      %527 = dma.done [#allocation5], 256
    $region29: #{att_forward.1} parent=1 // pred_fallthru
      _
    %528 = vsyncpa [#allocation3], 1
    %529 = vsyncpa [#allocation5], 1

</llo_original>
